<compile_context>
chip_gen: v6e
topology: v6e:2x2x1
jax: 0.10.0
libtpu: 0.0.40
codegen_flags: <defaults>
</compile_context>

<pallas_src>
import jax
import jax.numpy as jnp
from jax import lax
from jax.experimental import pallas as pl
from jax.experimental.pallas import tpu as pltpu


def _head_kernel(x_ref, wqkv_ref, o_ref):
    # x_ref: (B, T, C)   wqkv_ref: (C, 3H) = [Wq | Wk | Wv]   o_ref: (B, T, H)
    B, T, C = x_ref.shape
    H = o_ref.shape[-1]

    # Single fused QKV projection for ALL batch rows in one MXU push:
    # (B*T, C) @ (C, 3H) -> (B*T, 3H).  Collapsing the leading dims only
    # touches sublane layout, so the reshape is free.
    x2d = x_ref[...].reshape(B * T, C)
    qkv = jnp.dot(x2d, wqkv_ref[...], preferred_element_type=jnp.float32)

    # Fold the 1/sqrt(C) attention scale into q (B*T*H elems, not B*T*T).
    # NOTE: scale is C ** -0.5 (C = n_embd), matching the PyTorch module.
    q = qkv[:, 0 * H:1 * H] * (C ** -0.5)
    k = qkv[:, 1 * H:2 * H]
    v = qkv[:, 2 * H:3 * H]

    # Causal (lower-triangular) mask, built once and reused across the batch.
    row = lax.broadcasted_iota(jnp.int32, (T, T), 0)
    col = lax.broadcasted_iota(jnp.int32, (T, T), 1)
    causal = row >= col

    # Static (unrolled) loop over the tiny batch: each iteration is a pair of
    # clean 2-D MXU matmuls plus a (T, T) softmax.
    for b in range(B):
        qb = q[b * T:(b + 1) * T, :]
        kb = k[b * T:(b + 1) * T, :]
        vb = v[b * T:(b + 1) * T, :]

        # Scores: contract last dims of q and k (no explicit k transpose).
        wei = lax.dot_general(
            qb, kb, dimension_numbers=(((1,), (1,)), ((), ())),
            preferred_element_type=jnp.float32)          # (T, T)
        # Diagonal is always unmasked, so -inf + softmax is NaN-safe here.
        wei = jnp.where(causal, wei, -jnp.inf)

        # Numerically-stable softmax along the last axis.
        wei_max = jnp.max(wei, axis=-1, keepdims=True)
        p = jnp.exp(wei - wei_max)
        denom = jnp.sum(p, axis=-1, keepdims=True)
        # Multiply by reciprocal instead of dividing (approx=False keeps the
        # full-precision 1e-5 match against the f32 reference).
        p = p * pl.reciprocal(denom, approx=False)

        # TODO(synk): dropout omitted -- module evaluated in inference mode.

        o_ref[b, :, :] = jnp.dot(p, vb, preferred_element_type=jnp.float32)


def fuse_qkv_weights(wk, wq, wv):
    """Fuse the three (C, H) projection weights once: [Wq | Wk | Wv] -> (C, 3H)."""
    return jnp.concatenate([wq, wk, wv], axis=1)


@jax.jit
def head_forward(x, wqkv):
    """x: (B, T, C) f32; wqkv: (C, 3H) f32 (pre-fused) -> (B, T, H) f32."""
    B, T, C = x.shape
    H = wqkv.shape[1] // 3
    return pl.pallas_call(
        _head_kernel,
        out_shape=jax.ShapeDtypeStruct((B, T, H), jnp.float32),
        # No grid: single invocation, whole arrays resident in VMEM.
        in_specs=[
            pl.BlockSpec(memory_space=pltpu.MemorySpace.VMEM),
            pl.BlockSpec(memory_space=pltpu.MemorySpace.VMEM),
        ],
        out_specs=pl.BlockSpec(memory_space=pltpu.MemorySpace.VMEM),
    )(x, wqkv)


def _reference(x, wk, wq, wv):
    B, T, C = x.shape
    k = x @ wk
    q = x @ wq
    v = x @ wv
    wei = jnp.einsum("bth,bsh->bts", q, k) * (C ** -0.5)
    mask = jnp.tril(jnp.ones((T, T), dtype=bool))
    wei = jnp.where(mask, wei, -jnp.inf)
    wei = jax.nn.softmax(wei, axis=-1)
    return jnp.einsum("bts,bsh->bth", wei, v)


if __name__ == "__main__":
    # Module hyperparameters (synthetic, small)
    n_embd = 32       # C
    head_size = 16    # H
    block_size = 8    # T (T == block_size so tril[:T, :T] covers the full mask)
    B, T = 2, block_size

    key = jax.random.PRNGKey(0)
    kx, kk, kq, kv = jax.random.split(key, 4)

    x = jax.random.normal(kx, (B, T, n_embd), dtype=jnp.float32)
    # nn.Linear(n_embd, head_size, bias=False) weights, stored as (C, H)
    scale = 1.0 / (n_embd ** 0.5)
    wk = jax.random.uniform(kk, (n_embd, head_size), jnp.float32, -scale, scale)
    wq = jax.random.uniform(kq, (n_embd, head_size), jnp.float32, -scale, scale)
    wv = jax.random.uniform(kv, (n_embd, head_size), jnp.float32, -scale, scale)

    # Weights are static across calls: fuse once, outside the hot path.
    wqkv = fuse_qkv_weights(wk, wq, wv)
    jax.block_until_ready(wqkv)

    out = head_forward(x, wqkv)
    jax.block_until_ready(out)

    ref = _reference(x, wk, wq, wv)
    assert out.shape == (B, T, head_size)
    assert jnp.allclose(out, ref, atol=1e-5, rtol=1e-5), "mismatch vs reference"

    print("KERNEL_OK")
</pallas_src>

<mosaic_0001>
module attributes {stable_mosaic.version = 11 : i64} {
  func.func @_head_kernel(%arg0: memref<2x8x32xf32, #tpu.memory_space<vmem>>, %arg1: memref<32x48xf32, #tpu.memory_space<vmem>>, %arg2: memref<2x8x16xf32, #tpu.memory_space<vmem>>) attributes {dimension_semantics = [], scalar_prefetch = 0 : i64, scratch_operands = 0 : i64, tpu.core_type = #tpu.core_type<tc>} {
    %c0 = arith.constant 0 : index
    %c0_0 = arith.constant 0 : index
    %c0_1 = arith.constant 0 : index
    %0 = vector.load %arg0[%c0, %c0_0, %c0_1] : memref<2x8x32xf32, #tpu.memory_space<vmem>>, vector<2x8x32xf32>
    %1 = vector.shape_cast %0 : vector<2x8x32xf32> to vector<16x32xf32>
    %c0_2 = arith.constant 0 : index
    %c0_3 = arith.constant 0 : index
    %2 = vector.load %arg1[%c0_2, %c0_3] : memref<32x48xf32, #tpu.memory_space<vmem>>, vector<32x48xf32>
    %cst = arith.constant dense<0.000000e+00> : vector<16x48xf32>
    %3 = tpu.matmul %1, %2, %cst {dimension_numbers = #tpu.dot_dimension_numbers<[1], [0], [0], [1], [0, 0, 1, 1], [], []>} : vector<16x32xf32>, vector<32x48xf32>, vector<16x48xf32> -> vector<16x48xf32>
    %4 = vector.extract_strided_slice %3 {offsets = [0, 0], sizes = [16, 16], strides = [1, 1]} : vector<16x48xf32> to vector<16x16xf32>
    %cst_4 = arith.constant 0.176776692 : f32
    %5 = vector.broadcast %cst_4 : f32 to vector<16x16xf32>
    %6 = arith.mulf %4, %5 : vector<16x16xf32>
    %7 = vector.extract_strided_slice %3 {offsets = [0, 16], sizes = [16, 16], strides = [1, 1]} : vector<16x48xf32> to vector<16x16xf32>
    %8 = vector.extract_strided_slice %3 {offsets = [0, 32], sizes = [16, 16], strides = [1, 1]} : vector<16x48xf32> to vector<16x16xf32>
    %9 = tpu.iota {dimensions = array<i32: 0>} : vector<8x8xi32>
    %10 = tpu.iota {dimensions = array<i32: 1>} : vector<8x8xi32>
    %11 = arith.cmpi sge, %9, %10 : vector<8x8xi32>
    %12 = vector.extract_strided_slice %6 {offsets = [0, 0], sizes = [8, 16], strides = [1, 1]} : vector<16x16xf32> to vector<8x16xf32>
    %13 = vector.extract_strided_slice %7 {offsets = [0, 0], sizes = [8, 16], strides = [1, 1]} : vector<16x16xf32> to vector<8x16xf32>
    %14 = vector.extract_strided_slice %8 {offsets = [0, 0], sizes = [8, 16], strides = [1, 1]} : vector<16x16xf32> to vector<8x16xf32>
    %cst_5 = arith.constant dense<0.000000e+00> : vector<8x8xf32>
    %15 = tpu.matmul %12, %13, %cst_5 {dimension_numbers = #tpu.dot_dimension_numbers<[1], [1], [0], [0], [0, 0, 1, 0], [], []>} : vector<8x16xf32>, vector<8x16xf32>, vector<8x8xf32> -> vector<8x8xf32>
    %cst_6 = arith.constant 0xFF800000 : f32
    %16 = vector.broadcast %cst_6 : f32 to vector<8x8xf32>
    %17 = arith.select %11, %15, %16 : vector<8x8xi1>, vector<8x8xf32>
    %cst_7 = arith.constant dense<0xFF800000> : vector<8xf32>
    %18 = vector.multi_reduction <maximumf>, %17, %cst_7 [1] : vector<8x8xf32> to vector<8xf32>
    %19 = vector.shape_cast %18 : vector<8xf32> to vector<8x1xf32>
    %20 = vector.broadcast %19 : vector<8x1xf32> to vector<8x8xf32>
    %21 = arith.subf %17, %20 : vector<8x8xf32>
    %22 = math.exp %21 : vector<8x8xf32>
    %cst_8 = arith.constant dense<0.000000e+00> : vector<8xf32>
    %23 = vector.multi_reduction <add>, %22, %cst_8 [1] : vector<8x8xf32> to vector<8xf32>
    %24 = vector.shape_cast %23 : vector<8xf32> to vector<8x1xf32>
    %25 = tpu.reciprocal %24 : vector<8x1xf32> -> vector<8x1xf32>
    %26 = vector.broadcast %25 : vector<8x1xf32> to vector<8x8xf32>
    %27 = arith.mulf %22, %26 : vector<8x8xf32>
    %cst_9 = arith.constant dense<0.000000e+00> : vector<8x16xf32>
    %28 = tpu.matmul %27, %14, %cst_9 {dimension_numbers = #tpu.dot_dimension_numbers<[1], [0], [0], [1], [0, 0, 1, 1], [], []>} : vector<8x8xf32>, vector<8x16xf32>, vector<8x16xf32> -> vector<8x16xf32>
    %c0_10 = arith.constant 0 : index
    %c0_11 = arith.constant 0 : index
    %c0_12 = arith.constant 0 : index
    %29 = vector.load %arg2[%c0_10, %c0_11, %c0_12] : memref<2x8x16xf32, #tpu.memory_space<vmem>>, vector<1x8x16xf32>
    %30 = vector.shape_cast %29 : vector<1x8x16xf32> to vector<8x16xf32>
    %31 = vector.shape_cast %28 : vector<8x16xf32> to vector<1x8x16xf32>
    tpu.vector_store %arg2[%c0_10, %c0_11, %c0_12], %31 {strides = array<i32>} : memref<2x8x16xf32, #tpu.memory_space<vmem>>, vector<1x8x16xf32>,
    %32 = vector.extract_strided_slice %6 {offsets = [8, 0], sizes = [8, 16], strides = [1, 1]} : vector<16x16xf32> to vector<8x16xf32>
    %33 = vector.extract_strided_slice %7 {offsets = [8, 0], sizes = [8, 16], strides = [1, 1]} : vector<16x16xf32> to vector<8x16xf32>
    %34 = vector.extract_strided_slice %8 {offsets = [8, 0], sizes = [8, 16], strides = [1, 1]} : vector<16x16xf32> to vector<8x16xf32>
    %cst_13 = arith.constant dense<0.000000e+00> : vector<8x8xf32>
    %35 = tpu.matmul %32, %33, %cst_13 {dimension_numbers = #tpu.dot_dimension_numbers<[1], [1], [0], [0], [0, 0, 1, 0], [], []>} : vector<8x16xf32>, vector<8x16xf32>, vector<8x8xf32> -> vector<8x8xf32>
    %cst_14 = arith.constant 0xFF800000 : f32
    %36 = vector.broadcast %cst_14 : f32 to vector<8x8xf32>
    %37 = arith.select %11, %35, %36 : vector<8x8xi1>, vector<8x8xf32>
    %cst_15 = arith.constant dense<0xFF800000> : vector<8xf32>
    %38 = vector.multi_reduction <maximumf>, %37, %cst_15 [1] : vector<8x8xf32> to vector<8xf32>
    %39 = vector.shape_cast %38 : vector<8xf32> to vector<8x1xf32>
    %40 = vector.broadcast %39 : vector<8x1xf32> to vector<8x8xf32>
    %41 = arith.subf %37, %40 : vector<8x8xf32>
    %42 = math.exp %41 : vector<8x8xf32>
    %cst_16 = arith.constant dense<0.000000e+00> : vector<8xf32>
    %43 = vector.multi_reduction <add>, %42, %cst_16 [1] : vector<8x8xf32> to vector<8xf32>
    %44 = vector.shape_cast %43 : vector<8xf32> to vector<8x1xf32>
    %45 = tpu.reciprocal %44 : vector<8x1xf32> -> vector<8x1xf32>
    %46 = vector.broadcast %45 : vector<8x1xf32> to vector<8x8xf32>
    %47 = arith.mulf %42, %46 : vector<8x8xf32>
    %cst_17 = arith.constant dense<0.000000e+00> : vector<8x16xf32>
    %48 = tpu.matmul %47, %34, %cst_17 {dimension_numbers = #tpu.dot_dimension_numbers<[1], [0], [0], [1], [0, 0, 1, 1], [], []>} : vector<8x8xf32>, vector<8x16xf32>, vector<8x16xf32> -> vector<8x16xf32>
    %c1 = arith.constant 1 : index
    %c0_18 = arith.constant 0 : index
    %c0_19 = arith.constant 0 : index
    %49 = vector.load %arg2[%c1, %c0_18, %c0_19] : memref<2x8x16xf32, #tpu.memory_space<vmem>>, vector<1x8x16xf32>
    %50 = vector.shape_cast %49 : vector<1x8x16xf32> to vector<8x16xf32>
    %51 = vector.shape_cast %48 : vector<8x16xf32> to vector<1x8x16xf32>
    tpu.vector_store %arg2[%c1, %c0_18, %c0_19], %51 {strides = array<i32>} : memref<2x8x16xf32, #tpu.memory_space<vmem>>, vector<1x8x16xf32>,
    return
  }
}

</mosaic_0001>

<llo_original>
// kernel: head_forward.1
$region0: #{head_forward.1}
  #allocation0 [shape = 'u32[]', space=smem, size = 0x4, offset = 0x4, fixed_abs, tag = 'smem constant byte address 0x4 - core index']
  #allocation1 [shape = 'u32[144,128]{1,0:T(1,128)}', space=vmem, size = 0x12000, scoped, tag = 'internal scratch']
  %s0 = inlined_call_operand.hbm [shape: f32[2,8,32], index: 0, kind: input, shape index: {}]
  %s1 = inlined_call_operand.hbm [shape: f32[32,48], index: 1, kind: input, shape index: {}]
  %s2 = inlined_call_operand.hbm [shape: f32[2,8,16], index: 2, kind: output, shape index: {}]
  %s3 = sld [smem:[#allocation0]]
  $region26: #{head_forward.1} parent=0
    _
  %s5 = ssub.s32 1, %s3
  %s6 = scalar_select 0, %s5, %s3
  $region1: #{head_forward.1} parent=0
    #allocation2 [shape = 'u8[8192]{0}', space=vmem, size = 0x2000, scoped, tag = 'input window, operand 0, single buffered']
    #allocation3 [shape = 's32[1]{0}', space=sflag, size = 0x4, scoped, tag = 'scoped memory for head_forward.1']
    #allocation4 [shape = 's32[1]{0}', space=sflag, size = 0x4, scoped, tag = 'scoped memory for head_forward.1']
    #allocation5 [shape = 'u8[16384]{0}', space=vmem, size = 0x4000, scoped, tag = 'input window, operand 1, single buffered']
    #allocation6 [shape = 's32[1]{0}', space=sflag, size = 0x4, scoped, tag = 'scoped memory for head_forward.1']
    #allocation7 [shape = 'u8[8192]{0}', space=vmem, size = 0x2000, scoped, tag = 'output window, operand 0, single buffered']
    %7 = vsyncpa [#allocation3], 0
    %8 = vsyncpa [#allocation6], 0
    %9 = vsyncpa [#allocation4], 0
    // Predicated region
    $region2: #{head_forward.1} parent=1 // pred_check
      _
    $region3: #{head_forward.1} parent=1 // pred_check_branch
      %11 = sbr.rel (0) target = $region5
    $region4: #{head_forward.1} parent=1 // pred_region
      %s13 = ssub.s32 256, 256
      %14 = vsyncadd [#allocation3], %s13
      %s15 = sshll.u32 [#allocation2], 4
      %s16 = int_to_ptr.vmem [resolvable:$true] %s15
      %21 = dma.hbm_to_vmem [thread:$0]  %s0, 256, %s16, [#allocation3], 128, 128, 8
    $region5: #{head_forward.1} parent=1 // pred_fallthru
      _
    // Predicated region
    $region6: #{head_forward.1} parent=1 // pred_check
      _
    $region7: #{head_forward.1} parent=1 // pred_check_branch
      %23 = sbr.rel (0) target = $region9
    $region8: #{head_forward.1} parent=1 // pred_region
      %s25 = ssub.s32 512, 512
      %26 = vsyncadd [#allocation6], %s25
      %s27 = sshll.u32 [#allocation5], 4
      %s28 = int_to_ptr.vmem [resolvable:$true] %s27
      %33 = dma.hbm_to_vmem [thread:$0]  %s1, 512, %s28, [#allocation6], 128, 128, 8
    $region9: #{head_forward.1} parent=1 // pred_fallthru
      _
    // Predicated region
    $region10: #{head_forward.1} parent=1 // pred_check
      _
    $region11: #{head_forward.1} parent=1 // pred_check_branch
      %35 = sbr.rel (0) target = $region13
    $region12: #{head_forward.1} parent=1 // pred_region
      %36 = dma.done [#allocation3], 256
    $region13: #{head_forward.1} parent=1 // pred_fallthru
      _
    // Predicated region
    $region14: #{head_forward.1} parent=1 // pred_check
      _
    $region15: #{head_forward.1} parent=1 // pred_check_branch
      %38 = sbr.rel (0) target = $region17
    $region16: #{head_forward.1} parent=1 // pred_region
      %39 = dma.done [#allocation6], 512
    $region17: #{head_forward.1} parent=1 // pred_fallthru
      _
    %v40 = vld [vmem:[#allocation2] sm:$0xff]
    %v41 = vld [vmem:[#allocation2 + $0x8] sm:$0xff]
    %v42 = vld [vmem:[#allocation5] sm:$0xff]
    %v43 = vld [vmem:[#allocation5 + $0x8] sm:$0xff]
    %v44 = vld [vmem:[#allocation5 + $0x10] sm:$0xff]
    %v45 = vld [vmem:[#allocation5 + $0x18] sm:$0xff]
    %vm46 = vcmask 261120
    %v48 = vsel %vm46, %v40, 0
    %v51 = vsel %vm46, %v41, 0
    %53 = vmatprep.subr.mxu0 0.0
    %54 = vmatpush1.msra.mxu0 0.0
    %55 = vmatprep.subr.mxu0 0.0
    %56 = vmatpush1.msra.mxu0 0.0
    %57 = vmatprep.subr.mxu0 0.0
    %58 = vmatpush1.msra.mxu0 0.0
    %59 = vmatprep.subr.mxu0 0.0
    %60 = vmatpush1.msra.mxu0 0.0
    %61 = vmatprep.subr.mxu0 0.0
    %62 = vmatpush1.msra.mxu0 0.0
    %63 = vmatprep.subr.mxu0 0.0
    %64 = vmatpush1.msra.mxu0 0.0
    %65 = vmatprep.subr.mxu0 0.0
    %66 = vmatpush1.msra.mxu0 0.0
    %67 = vmatprep.subr.mxu0 0.0
    %68 = vmatpush1.msra.mxu0 0.0
    %69 = vmatprep.subr.mxu0 0.0
    %70 = vmatpush1.msra.mxu0 0.0
    %71 = vmatprep.subr.mxu0 0.0
    %72 = vmatpush1.msra.mxu0 0.0
    %73 = vmatprep.subr.mxu0 0.0
    %74 = vmatpush1.msra.mxu0 0.0
    %75 = vmatprep.subr.mxu0 0.0
    %76 = vmatpush1.msra.mxu0 0.0
    %77 = vmatprep.subr.mxu0 0.0
    %78 = vmatpush1.msra.mxu0 %v45
    %79 = vmatprep.subr.mxu0 0.0
    %80 = vmatpush1.msra.mxu0 %v44
    %81 = vmatprep.subr.mxu0 0.0
    %82 = vmatpush1.msra.mxu0 %v43
    %83 = vmatprep.subr.mxu0 0.0
    %84 = vmatpush1.msra.mxu0 %v42
    %85 = vmatprep.subr.mxu0 0.0
    %86 = vmatpush2.msra.mxu0 0.0
    %87 = vmatprep.subr.mxu0 0.0
    %88 = vmatpush2.msra.mxu0 0.0
    %89 = vmatprep.subr.mxu0 0.0
    %90 = vmatpush2.msra.mxu0 0.0
    %91 = vmatprep.subr.mxu0 0.0
    %92 = vmatpush2.msra.mxu0 0.0
    %93 = vmatprep.subr.mxu0 0.0
    %94 = vmatpush2.msra.mxu0 0.0
    %95 = vmatprep.subr.mxu0 0.0
    %96 = vmatpush2.msra.mxu0 0.0
    %97 = vmatprep.subr.mxu0 0.0
    %98 = vmatpush2.msra.mxu0 0.0
    %99 = vmatprep.subr.mxu0 0.0
    %100 = vmatpush2.msra.mxu0 0.0
    %101 = vmatprep.subr.mxu0 0.0
    %102 = vmatpush2.msra.mxu0 0.0
    %103 = vmatprep.subr.mxu0 0.0
    %104 = vmatpush2.msra.mxu0 0.0
    %105 = vmatprep.subr.mxu0 0.0
    %106 = vmatpush2.msra.mxu0 0.0
    %107 = vmatprep.subr.mxu0 0.0
    %108 = vmatpush2.msra.mxu0 0.0
    %109 = vmatprep.subr.mxu0 0.0
    %110 = vmatpush2.msra.mxu0 0.0
    %111 = vmatprep.subr.mxu0 0.0
    %112 = vmatpush2.msra.mxu0 0.0
    %113 = vmatprep.subr.mxu0 0.0
    %114 = vmatpush2.msra.mxu0 0.0
    %115 = vmatprep.subr.mxu0 0.0
    %116 = vmatpush2.msra.mxu0 0.0
    %117 = vmatprep.mubr.f32.mxu0 0.0
    %118 = vmatmul.mubr.f32.gmra.mxu0 %v48
    %v119 = vpop.f32.mrf.mxu0
    %v120 = vadd.f32 0.0, %v119
    %v121 = vpop.f32.mrf.mxu0
    %122 = vmatprep.mubr.f32.mxu0 0.0
    %123 = vmatmul.mubr.f32.gmra.mxu0 %v51
    %v124 = vpop.f32.mrf.mxu0
    %v125 = vadd.f32 0.0, %v124
    %v126 = vpop.f32.mrf.mxu0
    %127 = vdwg.mxu0
    %v128 = vmul.f32 %v120, 0.17677669
    %v129 = vmul.f32 %v125, 0.17677669
    %v130 = vlaneseq
    %v131 = vshrl.u32 %v130, 7
    %v132 = vlaneseq
    %v133 = vand.u32 %v132, 127
    %vm134 = vcmp.ge.s32.totalorder %v131, %v133
    %136 = vrot.lane.b32.xlu0 %v120, 112
    %v137 = vpop.permute.xlu0 %136
    %vm138 = vcmask 130048
    %v140 = vsel %vm138, %v128, 0
    %v142 = vsel %vm138, %v137, 0
    %144 = vmatprep.subr.mxu0 0.0
    %145 = vmatpush1.xpose.msra.mxu0 0.0
    %146 = vmatprep.subr.mxu0 0.0
    %147 = vmatpush1.xpose.msra.mxu0 0.0
    %148 = vmatprep.subr.mxu0 0.0
    %149 = vmatpush1.xpose.msra.mxu0 0.0
    %150 = vmatprep.subr.mxu0 0.0
    %151 = vmatpush1.xpose.msra.mxu0 0.0
    %152 = vmatprep.subr.mxu0 0.0
    %153 = vmatpush1.xpose.msra.mxu0 0.0
    %154 = vmatprep.subr.mxu0 0.0
    %155 = vmatpush1.xpose.msra.mxu0 0.0
    %156 = vmatprep.subr.mxu0 0.0
    %157 = vmatpush1.xpose.msra.mxu0 0.0
    %158 = vmatprep.subr.mxu0 0.0
    %159 = vmatpush1.xpose.msra.mxu0 0.0
    %160 = vmatprep.subr.mxu0 0.0
    %161 = vmatpush1.xpose.msra.mxu0 0.0
    %162 = vmatprep.subr.mxu0 0.0
    %163 = vmatpush1.xpose.msra.mxu0 0.0
    %164 = vmatprep.subr.mxu0 0.0
    %165 = vmatpush1.xpose.msra.mxu0 0.0
    %166 = vmatprep.subr.mxu0 0.0
    %167 = vmatpush1.xpose.msra.mxu0 0.0
    %168 = vmatprep.subr.mxu0 0.0
    %169 = vmatpush1.xpose.msra.mxu0 0.0
    %170 = vmatprep.subr.mxu0 0.0
    %171 = vmatpush1.xpose.msra.mxu0 0.0
    %172 = vmatprep.subr.mxu0 0.0
    %173 = vmatpush1.xpose.msra.mxu0 0.0
    %174 = vmatprep.subr.mxu0 0.0
    %175 = vmatpush1.xpose.msra.mxu0 %v142
    %176 = vmatprep.subr.mxu0 0.0
    %177 = vmatpush2.xpose.msra.mxu0 0.0
    %178 = vmatprep.subr.mxu0 0.0
    %179 = vmatpush2.xpose.msra.mxu0 0.0
    %180 = vmatprep.subr.mxu0 0.0
    %181 = vmatpush2.xpose.msra.mxu0 0.0
    %182 = vmatprep.subr.mxu0 0.0
    %183 = vmatpush2.xpose.msra.mxu0 0.0
    %184 = vmatprep.subr.mxu0 0.0
    %185 = vmatpush2.xpose.msra.mxu0 0.0
    %186 = vmatprep.subr.mxu0 0.0
    %187 = vmatpush2.xpose.msra.mxu0 0.0
    %188 = vmatprep.subr.mxu0 0.0
    %189 = vmatpush2.xpose.msra.mxu0 0.0
    %190 = vmatprep.subr.mxu0 0.0
    %191 = vmatpush2.xpose.msra.mxu0 0.0
    %192 = vmatprep.subr.mxu0 0.0
    %193 = vmatpush2.xpose.msra.mxu0 0.0
    %194 = vmatprep.subr.mxu0 0.0
    %195 = vmatpush2.xpose.msra.mxu0 0.0
    %196 = vmatprep.subr.mxu0 0.0
    %197 = vmatpush2.xpose.msra.mxu0 0.0
    %198 = vmatprep.subr.mxu0 0.0
    %199 = vmatpush2.xpose.msra.mxu0 0.0
    %200 = vmatprep.subr.mxu0 0.0
    %201 = vmatpush2.xpose.msra.mxu0 0.0
    %202 = vmatprep.subr.mxu0 0.0
    %203 = vmatpush2.xpose.msra.mxu0 0.0
    %204 = vmatprep.subr.mxu0 0.0
    %205 = vmatpush2.xpose.msra.mxu0 0.0
    %206 = vmatprep.subr.mxu0 0.0
    %207 = vmatpush2.xpose.msra.mxu0 0.0
    %208 = vmatprep.mubr.f32.mxu0 0.0
    %209 = vmatmul.mubr.f32.gmra.mxu0 %v140
    %v210 = vpop.f32.mrf.mxu0
    %v211 = vadd.f32 0.0, %v210
    %v212 = vpop.f32.mrf.mxu0
    %213 = vdwg.mxu0
    %v214 = vsel %vm134, %v211, -inf
    %vm215 = vcmask 64512
    %v216 = vsel %vm215, %v214, -inf
    %217 = vmax.xlane.f32.xlu0 %v216
    %v218 = vpop.xlane.xlu0 %217
    %v219 = vsub.f32 %v214, %v218
    %v220 = vmul.f32 %v219, 1.442695
    %v221 = vpow.pop %v220
    %v222 = vsel %vm215, %v221, 0.0
    %223 = vadd.xlane.f32.xlu0 %v222
    %v224 = vpop.xlane.xlu0 %223
    %v225 = vrcp.pop %v224
    %v226 = vmul.f32 %v221, %v225
    %227 = vrot.lane.b32.xlu0 %v120, 96
    %v228 = vpop.permute.xlu0 %227
    %v231 = vsel %vm215, %v226, 0
    %233 = vmatprep.subr.mxu0 0.0
    %234 = vmatpush1.msra.mxu0 0.0
    %235 = vmatprep.subr.mxu0 0.0
    %236 = vmatpush1.msra.mxu0 0.0
    %237 = vmatprep.subr.mxu0 0.0
    %238 = vmatpush1.msra.mxu0 0.0
    %239 = vmatprep.subr.mxu0 0.0
    %240 = vmatpush1.msra.mxu0 0.0
    %241 = vmatprep.subr.mxu0 0.0
    %242 = vmatpush1.msra.mxu0 0.0
    %243 = vmatprep.subr.mxu0 0.0
    %244 = vmatpush1.msra.mxu0 0.0
    %245 = vmatprep.subr.mxu0 0.0
    %246 = vmatpush1.msra.mxu0 0.0
    %247 = vmatprep.subr.mxu0 0.0
    %248 = vmatpush1.msra.mxu0 0.0
    %249 = vmatprep.subr.mxu0 0.0
    %250 = vmatpush1.msra.mxu0 0.0
    %251 = vmatprep.subr.mxu0 0.0
    %252 = vmatpush1.msra.mxu0 0.0
    %253 = vmatprep.subr.mxu0 0.0
    %254 = vmatpush1.msra.mxu0 0.0
    %255 = vmatprep.subr.mxu0 0.0
    %256 = vmatpush1.msra.mxu0 0.0
    %257 = vmatprep.subr.mxu0 0.0
    %258 = vmatpush1.msra.mxu0 0.0
    %259 = vmatprep.subr.mxu0 0.0
    %260 = vmatpush1.msra.mxu0 0.0
    %261 = vmatprep.subr.mxu0 0.0
    %262 = vmatpush1.msra.mxu0 0.0
    %263 = vmatprep.subr.mxu0 0.0
    %264 = vmatpush1.msra.mxu0 %v228
    %265 = vmatprep.subr.mxu0 0.0
    %266 = vmatpush2.msra.mxu0 0.0
    %267 = vmatprep.subr.mxu0 0.0
    %268 = vmatpush2.msra.mxu0 0.0
    %269 = vmatprep.subr.mxu0 0.0
    %270 = vmatpush2.msra.mxu0 0.0
    %271 = vmatprep.subr.mxu0 0.0
    %272 = vmatpush2.msra.mxu0 0.0
    %273 = vmatprep.subr.mxu0 0.0
    %274 = vmatpush2.msra.mxu0 0.0
    %275 = vmatprep.subr.mxu0 0.0
    %276 = vmatpush2.msra.mxu0 0.0
    %277 = vmatprep.subr.mxu0 0.0
    %278 = vmatpush2.msra.mxu0 0.0
    %279 = vmatprep.subr.mxu0 0.0
    %280 = vmatpush2.msra.mxu0 0.0
    %281 = vmatprep.subr.mxu0 0.0
    %282 = vmatpush2.msra.mxu0 0.0
    %283 = vmatprep.subr.mxu0 0.0
    %284 = vmatpush2.msra.mxu0 0.0
    %285 = vmatprep.subr.mxu0 0.0
    %286 = vmatpush2.msra.mxu0 0.0
    %287 = vmatprep.subr.mxu0 0.0
    %288 = vmatpush2.msra.mxu0 0.0
    %289 = vmatprep.subr.mxu0 0.0
    %290 = vmatpush2.msra.mxu0 0.0
    %291 = vmatprep.subr.mxu0 0.0
    %292 = vmatpush2.msra.mxu0 0.0
    %293 = vmatprep.subr.mxu0 0.0
    %294 = vmatpush2.msra.mxu0 0.0
    %295 = vmatprep.subr.mxu0 0.0
    %296 = vmatpush2.msra.mxu0 0.0
    %297 = vmatprep.mubr.f32.mxu0 0.0
    %298 = vmatmul.mubr.f32.gmra.mxu0 %v231
    %v299 = vpop.f32.mrf.mxu0
    %v300 = vadd.f32 0.0, %v299
    %v301 = vpop.f32.mrf.mxu0
    %302 = vdwg.mxu0
    %303 = vst.msk [vmem:[#allocation7] sm:$0xff] %vm138, %v300
    %305 = vrot.lane.b32.xlu0 %v125, 112
    %v306 = vpop.permute.xlu0 %305
    %v308 = vsel %vm138, %v129, 0
    %v310 = vsel %vm138, %v306, 0
    %312 = vmatprep.subr.mxu0 0.0
    %313 = vmatpush1.xpose.msra.mxu0 0.0
    %314 = vmatprep.subr.mxu0 0.0
    %315 = vmatpush1.xpose.msra.mxu0 0.0
    %316 = vmatprep.subr.mxu0 0.0
    %317 = vmatpush1.xpose.msra.mxu0 0.0
    %318 = vmatprep.subr.mxu0 0.0
    %319 = vmatpush1.xpose.msra.mxu0 0.0
    %320 = vmatprep.subr.mxu0 0.0
    %321 = vmatpush1.xpose.msra.mxu0 0.0
    %322 = vmatprep.subr.mxu0 0.0
    %323 = vmatpush1.xpose.msra.mxu0 0.0
    %324 = vmatprep.subr.mxu0 0.0
    %325 = vmatpush1.xpose.msra.mxu0 0.0
    %326 = vmatprep.subr.mxu0 0.0
    %327 = vmatpush1.xpose.msra.mxu0 0.0
    %328 = vmatprep.subr.mxu0 0.0
    %329 = vmatpush1.xpose.msra.mxu0 0.0
    %330 = vmatprep.subr.mxu0 0.0
    %331 = vmatpush1.xpose.msra.mxu0 0.0
    %332 = vmatprep.subr.mxu0 0.0
    %333 = vmatpush1.xpose.msra.mxu0 0.0
    %334 = vmatprep.subr.mxu0 0.0
    %335 = vmatpush1.xpose.msra.mxu0 0.0
    %336 = vmatprep.subr.mxu0 0.0
    %337 = vmatpush1.xpose.msra.mxu0 0.0
    %338 = vmatprep.subr.mxu0 0.0
    %339 = vmatpush1.xpose.msra.mxu0 0.0
    %340 = vmatprep.subr.mxu0 0.0
    %341 = vmatpush1.xpose.msra.mxu0 0.0
    %342 = vmatprep.subr.mxu0 0.0
    %343 = vmatpush1.xpose.msra.mxu0 %v310
    %344 = vmatprep.subr.mxu0 0.0
    %345 = vmatpush2.xpose.msra.mxu0 0.0
    %346 = vmatprep.subr.mxu0 0.0
    %347 = vmatpush2.xpose.msra.mxu0 0.0
    %348 = vmatprep.subr.mxu0 0.0
    %349 = vmatpush2.xpose.msra.mxu0 0.0
    %350 = vmatprep.subr.mxu0 0.0
    %351 = vmatpush2.xpose.msra.mxu0 0.0
    %352 = vmatprep.subr.mxu0 0.0
    %353 = vmatpush2.xpose.msra.mxu0 0.0
    %354 = vmatprep.subr.mxu0 0.0
    %355 = vmatpush2.xpose.msra.mxu0 0.0
    %356 = vmatprep.subr.mxu0 0.0
    %357 = vmatpush2.xpose.msra.mxu0 0.0
    %358 = vmatprep.subr.mxu0 0.0
    %359 = vmatpush2.xpose.msra.mxu0 0.0
    %360 = vmatprep.subr.mxu0 0.0
    %361 = vmatpush2.xpose.msra.mxu0 0.0
    %362 = vmatprep.subr.mxu0 0.0
    %363 = vmatpush2.xpose.msra.mxu0 0.0
    %364 = vmatprep.subr.mxu0 0.0
    %365 = vmatpush2.xpose.msra.mxu0 0.0
    %366 = vmatprep.subr.mxu0 0.0
    %367 = vmatpush2.xpose.msra.mxu0 0.0
    %368 = vmatprep.subr.mxu0 0.0
    %369 = vmatpush2.xpose.msra.mxu0 0.0
    %370 = vmatprep.subr.mxu0 0.0
    %371 = vmatpush2.xpose.msra.mxu0 0.0
    %372 = vmatprep.subr.mxu0 0.0
    %373 = vmatpush2.xpose.msra.mxu0 0.0
    %374 = vmatprep.subr.mxu0 0.0
    %375 = vmatpush2.xpose.msra.mxu0 0.0
    %376 = vmatprep.mubr.f32.mxu0 0.0
    %377 = vmatmul.mubr.f32.gmra.mxu0 %v308
    %v378 = vpop.f32.mrf.mxu0
    %v379 = vadd.f32 0.0, %v378
    %v380 = vpop.f32.mrf.mxu0
    %381 = vdwg.mxu0
    %v382 = vsel %vm134, %v379, -inf
    %v383 = vsel %vm215, %v382, -inf
    %384 = vmax.xlane.f32.xlu0 %v383
    %v385 = vpop.xlane.xlu0 %384
    %v386 = vsub.f32 %v382, %v385
    %v387 = vmul.f32 %v386, 1.442695
    %v388 = vpow.pop %v387
    %v389 = vsel %vm215, %v388, 0.0
    %390 = vadd.xlane.f32.xlu0 %v389
    %v391 = vpop.xlane.xlu0 %390
    %v392 = vrcp.pop %v391
    %v393 = vmul.f32 %v388, %v392
    %394 = vrot.lane.b32.xlu0 %v125, 96
    %v395 = vpop.permute.xlu0 %394
    %v398 = vsel %vm215, %v393, 0
    %400 = vmatprep.subr.mxu0 0.0
    %401 = vmatpush1.msra.mxu0 0.0
    %402 = vmatprep.subr.mxu0 0.0
    %403 = vmatpush1.msra.mxu0 0.0
    %404 = vmatprep.subr.mxu0 0.0
    %405 = vmatpush1.msra.mxu0 0.0
    %406 = vmatprep.subr.mxu0 0.0
    %407 = vmatpush1.msra.mxu0 0.0
    %408 = vmatprep.subr.mxu0 0.0
    %409 = vmatpush1.msra.mxu0 0.0
    %410 = vmatprep.subr.mxu0 0.0
    %411 = vmatpush1.msra.mxu0 0.0
    %412 = vmatprep.subr.mxu0 0.0
    %413 = vmatpush1.msra.mxu0 0.0
    %414 = vmatprep.subr.mxu0 0.0
    %415 = vmatpush1.msra.mxu0 0.0
    %416 = vmatprep.subr.mxu0 0.0
    %417 = vmatpush1.msra.mxu0 0.0
    %418 = vmatprep.subr.mxu0 0.0
    %419 = vmatpush1.msra.mxu0 0.0
    %420 = vmatprep.subr.mxu0 0.0
    %421 = vmatpush1.msra.mxu0 0.0
    %422 = vmatprep.subr.mxu0 0.0
    %423 = vmatpush1.msra.mxu0 0.0
    %424 = vmatprep.subr.mxu0 0.0
    %425 = vmatpush1.msra.mxu0 0.0
    %426 = vmatprep.subr.mxu0 0.0
    %427 = vmatpush1.msra.mxu0 0.0
    %428 = vmatprep.subr.mxu0 0.0
    %429 = vmatpush1.msra.mxu0 0.0
    %430 = vmatprep.subr.mxu0 0.0
    %431 = vmatpush1.msra.mxu0 %v395
    %432 = vmatprep.subr.mxu0 0.0
    %433 = vmatpush2.msra.mxu0 0.0
    %434 = vmatprep.subr.mxu0 0.0
    %435 = vmatpush2.msra.mxu0 0.0
    %436 = vmatprep.subr.mxu0 0.0
    %437 = vmatpush2.msra.mxu0 0.0
    %438 = vmatprep.subr.mxu0 0.0
    %439 = vmatpush2.msra.mxu0 0.0
    %440 = vmatprep.subr.mxu0 0.0
    %441 = vmatpush2.msra.mxu0 0.0
    %442 = vmatprep.subr.mxu0 0.0
    %443 = vmatpush2.msra.mxu0 0.0
    %444 = vmatprep.subr.mxu0 0.0
    %445 = vmatpush2.msra.mxu0 0.0
    %446 = vmatprep.subr.mxu0 0.0
    %447 = vmatpush2.msra.mxu0 0.0
    %448 = vmatprep.subr.mxu0 0.0
    %449 = vmatpush2.msra.mxu0 0.0
    %450 = vmatprep.subr.mxu0 0.0
    %451 = vmatpush2.msra.mxu0 0.0
    %452 = vmatprep.subr.mxu0 0.0
    %453 = vmatpush2.msra.mxu0 0.0
    %454 = vmatprep.subr.mxu0 0.0
    %455 = vmatpush2.msra.mxu0 0.0
    %456 = vmatprep.subr.mxu0 0.0
    %457 = vmatpush2.msra.mxu0 0.0
    %458 = vmatprep.subr.mxu0 0.0
    %459 = vmatpush2.msra.mxu0 0.0
    %460 = vmatprep.subr.mxu0 0.0
    %461 = vmatpush2.msra.mxu0 0.0
    %462 = vmatprep.subr.mxu0 0.0
    %463 = vmatpush2.msra.mxu0 0.0
    %464 = vmatprep.mubr.f32.mxu0 0.0
    %465 = vmatmul.mubr.f32.gmra.mxu0 %v398
    %v466 = vpop.f32.mrf.mxu0
    %v467 = vadd.f32 0.0, %v466
    %v468 = vpop.f32.mrf.mxu0
    %469 = vdwg.mxu0
    %s470 = scalar_lea.vmem [#allocation7], 8
    %471 = vst.msk [vmem:[%s470] sm:$0xff] %vm138, %v467
    // Predicated region
    $region18: #{head_forward.1} parent=1 // pred_check
      _
    $region19: #{head_forward.1} parent=1 // pred_check_branch
      %473 = sbr.rel (0) target = $region21
    $region20: #{head_forward.1} parent=1 // pred_region
      %s475 = ssub.s32 256, 256
      %476 = vsyncadd [#allocation4], %s475
      %s477 = sshll.u32 [#allocation7], 4
      %s478 = int_to_ptr.vmem [resolvable:$true] %s477
      %483 = dma.vmem_to_hbm [thread:$0]  %s478, 256, %s2, [#allocation4], 128, 128, 8
    $region21: #{head_forward.1} parent=1 // pred_fallthru
      _
    // Predicated region
    $region22: #{head_forward.1} parent=1 // pred_check
      _
    $region23: #{head_forward.1} parent=1 // pred_check_branch
      %485 = sbr.rel (0) target = $region25
    $region24: #{head_forward.1} parent=1 // pred_region
      %486 = dma.done [#allocation4], 256
    $region25: #{head_forward.1} parent=1 // pred_fallthru
      _
    %487 = vsyncpa [#allocation3], 1
    %488 = vsyncpa [#allocation6], 1
    %489 = vsyncpa [#allocation4], 1

</llo_original>
